<compile_context>
chip_gen: v7x
topology: tpu7x:2x2x1
jax: 0.10.0
libtpu: 0.0.40
codegen_flags: <defaults>
</compile_context>

<pallas_src>
import functools

import jax
import jax.numpy as jnp
from jax.experimental import pallas as pl
from jax.experimental.pallas import tpu as pltpu


def _round_up(n, m):
    return ((n + m - 1) // m) * m


def _pad2(a, rows, cols):
    return jnp.pad(a, ((0, rows - a.shape[0]), (0, cols - a.shape[1])))


def _vae_kernel(x_ref,
                w1e_ref, b1e_ref,
                wml_ref, bml_ref,       # fused [hidden, 2*D_lat] mean||logvar projection
                w1d_ref, b1d_ref,
                w2d_ref, b2d_ref,
                eps_ref,
                recon_ref, mulv_ref,
                *, d_lat):
    x = x_ref[...]

    # ---- Encoder ----
    h1 = jnp.dot(x, w1e_ref[...], preferred_element_type=jnp.float32) + b1e_ref[...]
    h1 = jnp.maximum(h1, 0.0)  # ReLU

    # Fused mean/logvar projection: one MXU pass over h1 instead of two.
    mulv = jnp.dot(h1, wml_ref[...], preferred_element_type=jnp.float32) + bml_ref[...]
    mean = mulv[:, :d_lat]
    logvar = mulv[:, d_lat:]

    # ---- Reparameterize (training mode) ----
    # Padded latent lanes carry logvar=0 / eps=0 / mean=0 -> z=0 there.
    z = mean + eps_ref[...] * jnp.exp(0.5 * logvar)

    # ---- Decoder ----
    h2 = jnp.dot(z, w1d_ref[...], preferred_element_type=jnp.float32) + b1d_ref[...]
    h2 = jnp.maximum(h2, 0.0)  # ReLU

    logits = jnp.dot(h2, w2d_ref[...], preferred_element_type=jnp.float32) + b2d_ref[...]
    recon = jax.nn.sigmoid(logits)  # lax.logistic -> EUP, not a VPU divide

    # Lane-dense (128-multiple wide) unmasked stores; wrapper slices back.
    recon_ref[...] = recon.astype(recon_ref.dtype)
    mulv_ref[...] = mulv.astype(mulv_ref.dtype)


@functools.partial(jax.jit, static_argnames=("batch_tile",))
def vae_forward(x, params, eps, batch_tile=256):
    """x: [B, input_size] f32; params: dict of (unpadded) weights/biases; eps: [B, latent_size]."""
    B, input_size = x.shape
    hidden_size = params["w1e"].shape[1]
    latent_size = params["wmu"].shape[1]

    # Pad feature dims to full 128-lane tiles.
    D_in = _round_up(input_size, 128)
    D_h = _round_up(hidden_size, 128)
    D_lat = _round_up(latent_size, 128)

    # Batch tile: largest of `batch_tile` rows (or the whole batch if smaller), 8-aligned.
    TB = batch_tile if B >= batch_tile else _round_up(B, 8)
    B_pad = _round_up(B, TB)

    # Zero-pad activations (padded rows/lanes contribute nothing through zero-padded weights).
    x_p = _pad2(x, B_pad, D_in)
    eps_p = _pad2(eps, B_pad, D_lat)

    # Zero-pad weights/biases; fuse the mean/logvar projection side-by-side.
    w1e = _pad2(params["w1e"], D_in, D_h)
    b1e = _pad2(params["b1e"], 1, D_h)
    wmu = _pad2(params["wmu"], D_h, D_lat)
    bmu = _pad2(params["bmu"], 1, D_lat)
    wlv = _pad2(params["wlv"], D_h, D_lat)
    blv = _pad2(params["blv"], 1, D_lat)
    wml = jnp.concatenate([wmu, wlv], axis=1)   # [D_h, 2*D_lat]
    bml = jnp.concatenate([bmu, blv], axis=1)   # [1, 2*D_lat]
    w1d = _pad2(params["w1d"], D_lat, D_h)
    b1d = _pad2(params["b1d"], 1, D_h)
    w2d = _pad2(params["w2d"], D_h, D_in)
    b2d = _pad2(params["b2d"], 1, D_in)

    grid = (B_pad // TB,)

    def act_spec(width):        # batch-tiled activations / outputs
        return pl.BlockSpec((TB, width), lambda i: (i, 0))

    def wt_spec(rows, cols):    # weights/biases: constant block -> resident in VMEM
        return pl.BlockSpec((rows, cols), lambda i: (0, 0))

    flops = 2 * B_pad * (D_in * D_h + D_h * (2 * D_lat) + D_lat * D_h + D_h * D_in)
    transcendentals = B_pad * (D_lat + D_in)                    # exp + sigmoid
    bytes_accessed = 4 * (
        B_pad * (D_in + D_lat)                                   # x, eps in
        + D_in * D_h + D_h * 2 * D_lat + D_lat * D_h + D_h * D_in  # weights
        + 2 * D_h + 2 * D_lat + D_in                             # biases
        + B_pad * (D_in + 2 * D_lat)                             # outputs
    )

    recon_p, mulv_p = pl.pallas_call(
        functools.partial(_vae_kernel, d_lat=D_lat),
        out_shape=(
            jax.ShapeDtypeStruct((B_pad, D_in), jnp.float32),        # reconstruction (padded)
            jax.ShapeDtypeStruct((B_pad, 2 * D_lat), jnp.float32),   # packed mean||logvar (padded)
        ),
        grid=grid,
        in_specs=[
            act_spec(D_in),              # x
            wt_spec(D_in, D_h),          # w1e
            wt_spec(1, D_h),             # b1e
            wt_spec(D_h, 2 * D_lat),     # wml (fused mu||logvar)
            wt_spec(1, 2 * D_lat),       # bml
            wt_spec(D_lat, D_h),         # w1d
            wt_spec(1, D_h),             # b1d
            wt_spec(D_h, D_in),          # w2d
            wt_spec(1, D_in),            # b2d
            act_spec(D_lat),             # eps
        ],
        out_specs=(act_spec(D_in), act_spec(2 * D_lat)),
        compiler_params=pltpu.CompilerParams(
            dimension_semantics=("parallel",),       # megacore-shard the batch axis
            vmem_limit_bytes=32 * 1024 * 1024,       # explicit, safe on v5e/v6e/v7x
        ),
        cost_estimate=pl.CostEstimate(
            flops=flops,
            transcendentals=transcendentals,
            bytes_accessed=bytes_accessed,
        ),
    )(x_p, w1e, b1e, wml, bml, w1d, b1d, w2d, b2d, eps_p)

    # Slice padded, packed outputs back to the module's shapes.
    recon = recon_p[:B, :input_size]
    mean = mulv_p[:B, :latent_size]
    logvar = mulv_p[:B, D_lat:D_lat + latent_size]
    return recon, mean, logvar
    # TODO(synk): optionally generate eps in-kernel (pltpu.prng_seed + stateful_normal) to
    # drop one HBM stream; kept as an explicit input for deterministic reference checking.


def init_vae_params(key, input_size, hidden_size, latent_size):
    """Deterministic init mimicking nn.Linear's uniform(-1/sqrt(fan_in), 1/sqrt(fan_in)).

    Weights stored [in_features, out_features] (transposed vs PyTorch's [out, in]);
    biases stored [1, out_features].
    """
    def linear(k, fan_in, fan_out):
        kw, kb = jax.random.split(k)
        bound = 1.0 / jnp.sqrt(fan_in)
        w = jax.random.uniform(kw, (fan_in, fan_out), jnp.float32, -bound, bound)
        b = jax.random.uniform(kb, (1, fan_out), jnp.float32, -bound, bound)
        return w, b

    keys = jax.random.split(key, 5)
    w1e, b1e = linear(keys[0], input_size, hidden_size)    # encoder.linear1
    wmu, bmu = linear(keys[1], hidden_size, latent_size)   # encoder.linear2_mean
    wlv, blv = linear(keys[2], hidden_size, latent_size)   # encoder.linear2_logvar
    w1d, b1d = linear(keys[3], latent_size, hidden_size)   # decoder.linear1
    w2d, b2d = linear(keys[4], hidden_size, input_size)    # decoder.linear2
    return {
        "w1e": w1e, "b1e": b1e,
        "wmu": wmu, "bmu": bmu,
        "wlv": wlv, "blv": blv,
        "w1d": w1d, "b1d": b1d,
        "w2d": w2d, "b2d": b2d,
    }


if __name__ == "__main__":
    key = jax.random.PRNGKey(0)
    k_x, k_p, k_eps = jax.random.split(key, 3)

    B, input_size, hidden_size, latent_size = 16, 64, 32, 16

    x = jax.random.normal(k_x, (B, input_size), jnp.float32)
    params = init_vae_params(k_p, input_size, hidden_size, latent_size)
    eps = jax.random.normal(k_eps, (B, latent_size), jnp.float32)

    recon, mean, logvar = vae_forward(x, params, eps)
    jax.block_until_ready((recon, mean, logvar))

    # quick pure-JAX reference check (unpadded math)
    def ref(x, p, eps):
        h1 = jax.nn.relu(x @ p["w1e"] + p["b1e"])
        mu = h1 @ p["wmu"] + p["bmu"]
        lv = h1 @ p["wlv"] + p["blv"]
        z = mu + eps * jnp.exp(0.5 * lv)
        h2 = jax.nn.relu(z @ p["w1d"] + p["b1d"])
        return jax.nn.sigmoid(h2 @ p["w2d"] + p["b2d"]), mu, lv

    r_ref, m_ref, lv_ref = ref(x, params, eps)
    assert recon.shape == (B, input_size) and mean.shape == (B, latent_size)
    assert jnp.allclose(recon, r_ref, atol=1e-5), "recon mismatch"
    assert jnp.allclose(mean, m_ref, atol=1e-5), "mean mismatch"
    assert jnp.allclose(logvar, lv_ref, atol=1e-5), "logvar mismatch"

    print("KERNEL_OK")
</pallas_src>

<mosaic_0001>
module attributes {stable_mosaic.version = 11 : i64} {
  func.func @_vae_kernel(%arg0: i32, %arg1: memref<16x128xf32, #tpu.memory_space<vmem>>, %arg2: memref<128x128xf32, #tpu.memory_space<vmem>>, %arg3: memref<1x128xf32, #tpu.memory_space<vmem>>, %arg4: memref<128x256xf32, #tpu.memory_space<vmem>>, %arg5: memref<1x256xf32, #tpu.memory_space<vmem>>, %arg6: memref<128x128xf32, #tpu.memory_space<vmem>>, %arg7: memref<1x128xf32, #tpu.memory_space<vmem>>, %arg8: memref<128x128xf32, #tpu.memory_space<vmem>>, %arg9: memref<1x128xf32, #tpu.memory_space<vmem>>, %arg10: memref<16x128xf32, #tpu.memory_space<vmem>>, %arg11: memref<16x128xf32, #tpu.memory_space<vmem>>, %arg12: memref<16x256xf32, #tpu.memory_space<vmem>>) attributes {dimension_semantics = [#tpu.dimension_semantics<parallel>], iteration_bounds = array<i64: 1>, scalar_prefetch = 0 : i64, scratch_operands = 0 : i64, tpu.core_type = #tpu.core_type<tc>, window_params = [{transform_indices = @transform_0, window_bounds = array<i64: 16, 128>}, {pipeline_mode = #tpu.pipeline_mode<synchronous>, transform_indices = @transform_1, window_bounds = array<i64: 128, 128>}, {pipeline_mode = #tpu.pipeline_mode<synchronous>, transform_indices = @transform_2, window_bounds = array<i64: 1, 128>}, {pipeline_mode = #tpu.pipeline_mode<synchronous>, transform_indices = @transform_3, window_bounds = array<i64: 128, 256>}, {pipeline_mode = #tpu.pipeline_mode<synchronous>, transform_indices = @transform_4, window_bounds = array<i64: 1, 256>}, {pipeline_mode = #tpu.pipeline_mode<synchronous>, transform_indices = @transform_5, window_bounds = array<i64: 128, 128>}, {pipeline_mode = #tpu.pipeline_mode<synchronous>, transform_indices = @transform_6, window_bounds = array<i64: 1, 128>}, {pipeline_mode = #tpu.pipeline_mode<synchronous>, transform_indices = @transform_7, window_bounds = array<i64: 128, 128>}, {pipeline_mode = #tpu.pipeline_mode<synchronous>, transform_indices = @transform_8, window_bounds = array<i64: 1, 128>}, {transform_indices = @transform_9, window_bounds = array<i64: 16, 128>}, {transform_indices = @transform_10, window_bounds = array<i64: 16, 128>}, {transform_indices = @transform_11, window_bounds = array<i64: 16, 256>}]} {
    %c0 = arith.constant 0 : index
    %c0_0 = arith.constant 0 : index
    %0 = vector.load %arg1[%c0, %c0_0] : memref<16x128xf32, #tpu.memory_space<vmem>>, vector<16x128xf32>
    %c0_1 = arith.constant 0 : index
    %c0_2 = arith.constant 0 : index
    %1 = vector.load %arg2[%c0_1, %c0_2] : memref<128x128xf32, #tpu.memory_space<vmem>>, vector<128x128xf32>
    %cst = arith.constant dense<0.000000e+00> : vector<16x128xf32>
    %2 = tpu.matmul %0, %1, %cst {dimension_numbers = #tpu.dot_dimension_numbers<[1], [0], [0], [1], [0, 0, 1, 1], [], []>} : vector<16x128xf32>, vector<128x128xf32>, vector<16x128xf32> -> vector<16x128xf32>
    %c0_3 = arith.constant 0 : index
    %c0_4 = arith.constant 0 : index
    %3 = vector.load %arg3[%c0_3, %c0_4] : memref<1x128xf32, #tpu.memory_space<vmem>>, vector<1x128xf32>
    %4 = vector.broadcast %3 : vector<1x128xf32> to vector<16x128xf32>
    %5 = arith.addf %2, %4 : vector<16x128xf32>
    %cst_5 = arith.constant 0.000000e+00 : f32
    %6 = vector.broadcast %cst_5 : f32 to vector<16x128xf32>
    %7 = arith.maximumf %5, %6 : vector<16x128xf32>
    %c0_6 = arith.constant 0 : index
    %c0_7 = arith.constant 0 : index
    %8 = vector.load %arg4[%c0_6, %c0_7] : memref<128x256xf32, #tpu.memory_space<vmem>>, vector<128x256xf32>
    %cst_8 = arith.constant dense<0.000000e+00> : vector<16x256xf32>
    %9 = tpu.matmul %7, %8, %cst_8 {dimension_numbers = #tpu.dot_dimension_numbers<[1], [0], [0], [1], [0, 0, 1, 1], [], []>} : vector<16x128xf32>, vector<128x256xf32>, vector<16x256xf32> -> vector<16x256xf32>
    %c0_9 = arith.constant 0 : index
    %c0_10 = arith.constant 0 : index
    %10 = vector.load %arg5[%c0_9, %c0_10] : memref<1x256xf32, #tpu.memory_space<vmem>>, vector<1x256xf32>
    %11 = vector.broadcast %10 : vector<1x256xf32> to vector<16x256xf32>
    %12 = arith.addf %9, %11 : vector<16x256xf32>
    %13 = vector.extract_strided_slice %12 {offsets = [0, 0], sizes = [16, 128], strides = [1, 1]} : vector<16x256xf32> to vector<16x128xf32>
    %14 = vector.extract_strided_slice %12 {offsets = [0, 128], sizes = [16, 128], strides = [1, 1]} : vector<16x256xf32> to vector<16x128xf32>
    %c0_11 = arith.constant 0 : index
    %c0_12 = arith.constant 0 : index
    %15 = vector.load %arg10[%c0_11, %c0_12] : memref<16x128xf32, #tpu.memory_space<vmem>>, vector<16x128xf32>
    %cst_13 = arith.constant 5.000000e-01 : f32
    %16 = vector.broadcast %cst_13 : f32 to vector<16x128xf32>
    %17 = arith.mulf %16, %14 : vector<16x128xf32>
    %18 = math.exp %17 : vector<16x128xf32>
    %19 = arith.mulf %15, %18 : vector<16x128xf32>
    %20 = arith.addf %13, %19 : vector<16x128xf32>
    %c0_14 = arith.constant 0 : index
    %c0_15 = arith.constant 0 : index
    %21 = vector.load %arg6[%c0_14, %c0_15] : memref<128x128xf32, #tpu.memory_space<vmem>>, vector<128x128xf32>
    %cst_16 = arith.constant dense<0.000000e+00> : vector<16x128xf32>
    %22 = tpu.matmul %20, %21, %cst_16 {dimension_numbers = #tpu.dot_dimension_numbers<[1], [0], [0], [1], [0, 0, 1, 1], [], []>} : vector<16x128xf32>, vector<128x128xf32>, vector<16x128xf32> -> vector<16x128xf32>
    %c0_17 = arith.constant 0 : index
    %c0_18 = arith.constant 0 : index
    %23 = vector.load %arg7[%c0_17, %c0_18] : memref<1x128xf32, #tpu.memory_space<vmem>>, vector<1x128xf32>
    %24 = vector.broadcast %23 : vector<1x128xf32> to vector<16x128xf32>
    %25 = arith.addf %22, %24 : vector<16x128xf32>
    %cst_19 = arith.constant 0.000000e+00 : f32
    %26 = vector.broadcast %cst_19 : f32 to vector<16x128xf32>
    %27 = arith.maximumf %25, %26 : vector<16x128xf32>
    %c0_20 = arith.constant 0 : index
    %c0_21 = arith.constant 0 : index
    %28 = vector.load %arg8[%c0_20, %c0_21] : memref<128x128xf32, #tpu.memory_space<vmem>>, vector<128x128xf32>
    %cst_22 = arith.constant dense<0.000000e+00> : vector<16x128xf32>
    %29 = tpu.matmul %27, %28, %cst_22 {dimension_numbers = #tpu.dot_dimension_numbers<[1], [0], [0], [1], [0, 0, 1, 1], [], []>} : vector<16x128xf32>, vector<128x128xf32>, vector<16x128xf32> -> vector<16x128xf32>
    %c0_23 = arith.constant 0 : index
    %c0_24 = arith.constant 0 : index
    %30 = vector.load %arg9[%c0_23, %c0_24] : memref<1x128xf32, #tpu.memory_space<vmem>>, vector<1x128xf32>
    %31 = vector.broadcast %30 : vector<1x128xf32> to vector<16x128xf32>
    %32 = arith.addf %29, %31 : vector<16x128xf32>
    %33 = arith.negf %32 : vector<16x128xf32>
    %34 = math.exp %33 : vector<16x128xf32>
    %cst_25 = arith.constant 1.000000e+00 : f32
    %35 = vector.broadcast %cst_25 : f32 to vector<16x128xf32>
    %36 = arith.addf %35, %34 : vector<16x128xf32>
    %37 = arith.divf %35, %36 : vector<16x128xf32>
    %c0_26 = arith.constant 0 : index
    %c0_27 = arith.constant 0 : index
    %38 = vector.load %arg11[%c0_26, %c0_27] : memref<16x128xf32, #tpu.memory_space<vmem>>, vector<16x128xf32>
    tpu.vector_store %arg11[%c0_26, %c0_27], %37 {strides = array<i32>} : memref<16x128xf32, #tpu.memory_space<vmem>>, vector<16x128xf32>,
    %c0_28 = arith.constant 0 : index
    %c0_29 = arith.constant 0 : index
    %39 = vector.load %arg12[%c0_28, %c0_29] : memref<16x256xf32, #tpu.memory_space<vmem>>, vector<16x256xf32>
    tpu.vector_store %arg12[%c0_28, %c0_29], %12 {strides = array<i32>} : memref<16x256xf32, #tpu.memory_space<vmem>>, vector<16x256xf32>,
    return
  }
  func.func @transform_0(%arg0: i32) -> (i32, i32) {
    %c0_i32 = arith.constant 0 : i32
    %c0_i32_0 = arith.constant 0 : i32
    return %arg0, %c0_i32 : i32, i32
  }
  func.func @transform_1(%arg0: i32) -> (i32, i32) {
    %c0_i32 = arith.constant 0 : i32
    %c0_i32_0 = arith.constant 0 : i32
    %c0_i32_1 = arith.constant 0 : i32
    return %c0_i32, %c0_i32_0 : i32, i32
  }
  func.func @transform_2(%arg0: i32) -> (i32, i32) {
    %c0_i32 = arith.constant 0 : i32
    %c0_i32_0 = arith.constant 0 : i32
    %c0_i32_1 = arith.constant 0 : i32
    return %c0_i32, %c0_i32_0 : i32, i32
  }
  func.func @transform_3(%arg0: i32) -> (i32, i32) {
    %c0_i32 = arith.constant 0 : i32
    %c0_i32_0 = arith.constant 0 : i32
    %c0_i32_1 = arith.constant 0 : i32
    return %c0_i32, %c0_i32_0 : i32, i32
  }
  func.func @transform_4(%arg0: i32) -> (i32, i32) {
    %c0_i32 = arith.constant 0 : i32
    %c0_i32_0 = arith.constant 0 : i32
    %c0_i32_1 = arith.constant 0 : i32
    return %c0_i32, %c0_i32_0 : i32, i32
  }
  func.func @transform_5(%arg0: i32) -> (i32, i32) {
    %c0_i32 = arith.constant 0 : i32
    %c0_i32_0 = arith.constant 0 : i32
    %c0_i32_1 = arith.constant 0 : i32
    return %c0_i32, %c0_i32_0 : i32, i32
  }
  func.func @transform_6(%arg0: i32) -> (i32, i32) {
    %c0_i32 = arith.constant 0 : i32
    %c0_i32_0 = arith.constant 0 : i32
    %c0_i32_1 = arith.constant 0 : i32
    return %c0_i32, %c0_i32_0 : i32, i32
  }
  func.func @transform_7(%arg0: i32) -> (i32, i32) {
    %c0_i32 = arith.constant 0 : i32
    %c0_i32_0 = arith.constant 0 : i32
    %c0_i32_1 = arith.constant 0 : i32
    return %c0_i32, %c0_i32_0 : i32, i32
  }
  func.func @transform_8(%arg0: i32) -> (i32, i32) {
    %c0_i32 = arith.constant 0 : i32
    %c0_i32_0 = arith.constant 0 : i32
    %c0_i32_1 = arith.constant 0 : i32
    return %c0_i32, %c0_i32_0 : i32, i32
  }
  func.func @transform_9(%arg0: i32) -> (i32, i32) {
    %c0_i32 = arith.constant 0 : i32
    %c0_i32_0 = arith.constant 0 : i32
    return %arg0, %c0_i32 : i32, i32
  }
  func.func @transform_10(%arg0: i32) -> (i32, i32) {
    %c0_i32 = arith.constant 0 : i32
    %c0_i32_0 = arith.constant 0 : i32
    return %arg0, %c0_i32 : i32, i32
  }
  func.func @transform_11(%arg0: i32) -> (i32, i32) {
    %c0_i32 = arith.constant 0 : i32
    %c0_i32_0 = arith.constant 0 : i32
    return %arg0, %c0_i32 : i32, i32
  }
}

</mosaic_0001>

<llo_original>
// kernel: vae_forward.1
$region0: #{vae_forward.1}
  #allocation0 [shape = 'u32[]', space=smem, size = 0x4, offset = 0x4, fixed_abs, tag = 'smem constant byte address 0x4 - core index']
  #allocation1 [shape = 'u32[144,128]{1,0:T(1,128)}', space=vmem, size = 0x12000, scoped, tag = 'internal scratch']
  %s0 = inlined_call_operand.vmem [shape: f32[16,128], index: 0, kind: input, shape index: {}]
  %s1 = inlined_call_operand.vmem [shape: f32[128,128], index: 1, kind: input, shape index: {}]
  %s2 = inlined_call_operand.vmem [shape: f32[1,128], index: 2, kind: input, shape index: {}]
  %s3 = inlined_call_operand.vmem [shape: f32[128,256], index: 3, kind: input, shape index: {}]
  %s4 = inlined_call_operand.vmem [shape: f32[1,256], index: 4, kind: input, shape index: {}]
  %s5 = inlined_call_operand.vmem [shape: f32[128,128], index: 5, kind: input, shape index: {}]
  %s6 = inlined_call_operand.vmem [shape: f32[1,128], index: 6, kind: input, shape index: {}]
  %s7 = inlined_call_operand.vmem [shape: f32[128,128], index: 7, kind: input, shape index: {}]
  %s8 = inlined_call_operand.vmem [shape: f32[1,128], index: 8, kind: input, shape index: {}]
  %s9 = inlined_call_operand.vmem [shape: f32[16,128], index: 9, kind: input, shape index: {}]
  %s10 = inlined_call_operand.hbm [shape: f32[16,128], index: 10, kind: output, shape index: {0}]
  %s11 = inlined_call_operand.vmem [shape: f32[16,256], index: 11, kind: output, shape index: {1}]
  %12 = xla_tuple %s10, %s11
  %s13 = sld [smem:[#allocation0]]
  $region58: #{vae_forward.1} parent=0
    _
  %s15 = ssub.s32 1, %s13
  %s16 = scalar_select 0, %s15, %s13
  $region1: #{vae_forward.1} parent=0
    #allocation2 [shape = 'u8[8192]{0}', space=vmem, size = 0x2000, scoped, tag = 'output window, operand 0, single buffered']
    #allocation3 [shape = 's32[1]{0}', space=sflag, size = 0x4, scoped, tag = 'scoped memory for vae_forward.1']
    %17 = vsyncpa [#allocation3], 0
    // Predicated region
    $region2: #{vae_forward.1} parent=1 // pred_check
      _
    $region3: #{vae_forward.1} parent=1 // pred_check_branch
      %19 = sbr.rel (0) target = $region5
    $region4: #{vae_forward.1} parent=1 // pred_region
      _
    $region5: #{vae_forward.1} parent=1 // pred_fallthru
      _
    // Predicated region
    $region6: #{vae_forward.1} parent=1 // pred_check
      _
    $region7: #{vae_forward.1} parent=1 // pred_check_branch
      %21 = sbr.rel (0) target = $region9
    $region8: #{vae_forward.1} parent=1 // pred_region
      _
    $region9: #{vae_forward.1} parent=1 // pred_fallthru
      _
    // Predicated region
    $region10: #{vae_forward.1} parent=1 // pred_check
      _
    $region11: #{vae_forward.1} parent=1 // pred_check_branch
      %23 = sbr.rel (0) target = $region13
    $region12: #{vae_forward.1} parent=1 // pred_region
      _
    $region13: #{vae_forward.1} parent=1 // pred_fallthru
      _
    // Predicated region
    $region14: #{vae_forward.1} parent=1 // pred_check
      _
    $region15: #{vae_forward.1} parent=1 // pred_check_branch
      %25 = sbr.rel (0) target = $region17
    $region16: #{vae_forward.1} parent=1 // pred_region
      _
    $region17: #{vae_forward.1} parent=1 // pred_fallthru
      _
    // Predicated region
    $region18: #{vae_forward.1} parent=1 // pred_check
      _
    $region19: #{vae_forward.1} parent=1 // pred_check_branch
      %27 = sbr.rel (0) target = $region21
    $region20: #{vae_forward.1} parent=1 // pred_region
      _
    $region21: #{vae_forward.1} parent=1 // pred_fallthru
      _
    // Predicated region
    $region22: #{vae_forward.1} parent=1 // pred_check
      _
    $region23: #{vae_forward.1} parent=1 // pred_check_branch
      %29 = sbr.rel (0) target = $region25
    $region24: #{vae_forward.1} parent=1 // pred_region
      _
    $region25: #{vae_forward.1} parent=1 // pred_fallthru
      _
    // Predicated region
    $region26: #{vae_forward.1} parent=1 // pred_check
      _
    $region27: #{vae_forward.1} parent=1 // pred_check_branch
      %31 = sbr.rel (0) target = $region29
    $region28: #{vae_forward.1} parent=1 // pred_region
      _
    $region29: #{vae_forward.1} parent=1 // pred_fallthru
      _
    // Predicated region
    $region30: #{vae_forward.1} parent=1 // pred_check
      _
    $region31: #{vae_forward.1} parent=1 // pred_check_branch
      %33 = sbr.rel (0) target = $region33
    $region32: #{vae_forward.1} parent=1 // pred_region
      _
    $region33: #{vae_forward.1} parent=1 // pred_fallthru
      _
    // Predicated region
    $region34: #{vae_forward.1} parent=1 // pred_check
      _
    $region35: #{vae_forward.1} parent=1 // pred_check_branch
      %35 = sbr.rel (0) target = $region37
    $region36: #{vae_forward.1} parent=1 // pred_region
      _
    $region37: #{vae_forward.1} parent=1 // pred_fallthru
      _
    // Predicated region
    $region38: #{vae_forward.1} parent=1 // pred_check
      _
    $region39: #{vae_forward.1} parent=1 // pred_check_branch
      %37 = sbr.rel (0) target = $region41
    $region40: #{vae_forward.1} parent=1 // pred_region
      _
    $region41: #{vae_forward.1} parent=1 // pred_fallthru
      _
    %v38 = vld [vmem:[%s0] sm:$0xff]
    %v39 = vld [vmem:[%s0 + $0x8] sm:$0xff]
    %v40 = vld [vmem:[%s1] sm:$0xff]
    %v41 = vld [vmem:[%s1 + $0x8] sm:$0xff]
    %v42 = vld [vmem:[%s1 + $0x10] sm:$0xff]
    %v43 = vld [vmem:[%s1 + $0x18] sm:$0xff]
    %v44 = vld [vmem:[%s1 + $0x20] sm:$0xff]
    %v45 = vld [vmem:[%s1 + $0x28] sm:$0xff]
    %v46 = vld [vmem:[%s1 + $0x30] sm:$0xff]
    %v47 = vld [vmem:[%s1 + $0x38] sm:$0xff]
    %v48 = vld [vmem:[%s1 + $0x40] sm:$0xff]
    %v49 = vld [vmem:[%s1 + $0x48] sm:$0xff]
    %v50 = vld [vmem:[%s1 + $0x50] sm:$0xff]
    %v51 = vld [vmem:[%s1 + $0x58] sm:$0xff]
    %v52 = vld [vmem:[%s1 + $0x60] sm:$0xff]
    %v53 = vld [vmem:[%s1 + $0x68] sm:$0xff]
    %v54 = vld [vmem:[%s1 + $0x70] sm:$0xff]
    %v55 = vld [vmem:[%s1 + $0x78] sm:$0xff]
    %v56 = vld [vmem:[%s2] sm:$0x1]
    %v58 = vlaneseq
    %v59 = vshrl.u32 %v58, 7
    %v60 = vsub.s32 0, %v59
    %v61 = vrot.slane %v56, %v60
    %63 = vmatprep.subr.mxu0 0.0
    %64 = vmatpush1.msra.mxu0 %v40
    %65 = vmatprep.subr.mxu0 0.0
    %66 = vmatpush1.msra.mxu0 %v41
    %67 = vmatprep.subr.mxu0 0.0
    %68 = vmatpush1.msra.mxu0 %v42
    %69 = vmatprep.subr.mxu0 0.0
    %70 = vmatpush1.msra.mxu0 %v43
    %71 = vmatprep.subr.mxu0 0.0
    %72 = vmatpush1.msra.mxu0 %v44
    %73 = vmatprep.subr.mxu0 0.0
    %74 = vmatpush1.msra.mxu0 %v45
    %75 = vmatprep.subr.mxu0 0.0
    %76 = vmatpush1.msra.mxu0 %v46
    %77 = vmatprep.subr.mxu0 0.0
    %78 = vmatpush1.msra.mxu0 %v47
    %79 = vmatprep.subr.mxu0 0.0
    %80 = vmatpush1.msra.mxu0 %v48
    %81 = vmatprep.subr.mxu0 0.0
    %82 = vmatpush1.msra.mxu0 %v49
    %83 = vmatprep.subr.mxu0 0.0
    %84 = vmatpush1.msra.mxu0 %v50
    %85 = vmatprep.subr.mxu0 0.0
    %86 = vmatpush1.msra.mxu0 %v51
    %87 = vmatprep.subr.mxu0 0.0
    %88 = vmatpush1.msra.mxu0 %v52
    %89 = vmatprep.subr.mxu0 0.0
    %90 = vmatpush1.msra.mxu0 %v53
    %91 = vmatprep.subr.mxu0 0.0
    %92 = vmatpush1.msra.mxu0 %v54
    %93 = vmatprep.subr.mxu0 0.0
    %94 = vmatpush1.msra.mxu0 %v55
    %95 = vmatprep.subr.mxu0 0.0
    %96 = vmatpush1.msra.mxu0 0.0
    %97 = vmatprep.subr.mxu0 0.0
    %98 = vmatpush1.msra.mxu0 0.0
    %99 = vmatprep.subr.mxu0 0.0
    %100 = vmatpush1.msra.mxu0 0.0
    %101 = vmatprep.subr.mxu0 0.0
    %102 = vmatpush1.msra.mxu0 0.0
    %103 = vmatprep.subr.mxu0 0.0
    %104 = vmatpush1.msra.mxu0 0.0
    %105 = vmatprep.subr.mxu0 0.0
    %106 = vmatpush1.msra.mxu0 0.0
    %107 = vmatprep.subr.mxu0 0.0
    %108 = vmatpush1.msra.mxu0 0.0
    %109 = vmatprep.subr.mxu0 0.0
    %110 = vmatpush1.msra.mxu0 0.0
    %111 = vmatprep.subr.mxu0 0.0
    %112 = vmatpush1.msra.mxu0 0.0
    %113 = vmatprep.subr.mxu0 0.0
    %114 = vmatpush1.msra.mxu0 0.0
    %115 = vmatprep.subr.mxu0 0.0
    %116 = vmatpush1.msra.mxu0 0.0
    %117 = vmatprep.subr.mxu0 0.0
    %118 = vmatpush1.msra.mxu0 0.0
    %119 = vmatprep.subr.mxu0 0.0
    %120 = vmatpush1.msra.mxu0 0.0
    %121 = vmatprep.subr.mxu0 0.0
    %122 = vmatpush1.msra.mxu0 0.0
    %123 = vmatprep.subr.mxu0 0.0
    %124 = vmatpush1.msra.mxu0 0.0
    %125 = vmatprep.subr.mxu0 0.0
    %126 = vmatpush1.msra.mxu0 0.0
    %127 = vmatprep.mubr.f32.mxu0 0.0
    %128 = vmatmul.mubr.f32.gmra.mrb[0].mxu0 %v38
    %v129 = vpop.f32.mrb[0].mxu0
    %v130 = vadd.f32 %v61, %v129
    %v131 = vpop.f32.mrb[0].mxu0
    %132 = vmatprep.mubr.f32.mxu0 0.0
    %133 = vmatmul.mubr.f32.gmra.mrb[0].mxu0 %v39
    %v134 = vpop.f32.mrb[0].mxu0
    %v135 = vadd.f32 %v61, %v134
    %v136 = vpop.f32.mrb[0].mxu0
    %137 = vdwg.mxu0
    %v138 = vmax.f32 %v130, 0.0
    %v139 = vmax.f32 %v135, 0.0
    %v140 = vld [vmem:[%s3] sm:$0xff]
    %v141 = vld [vmem:[%s3 + $0x8] sm:$0xff]
    %v142 = vld [vmem:[%s3 + $0x10] sm:$0xff]
    %v143 = vld [vmem:[%s3 + $0x18] sm:$0xff]
    %v144 = vld [vmem:[%s3 + $0x20] sm:$0xff]
    %v145 = vld [vmem:[%s3 + $0x28] sm:$0xff]
    %v146 = vld [vmem:[%s3 + $0x30] sm:$0xff]
    %v147 = vld [vmem:[%s3 + $0x38] sm:$0xff]
    %v148 = vld [vmem:[%s3 + $0x40] sm:$0xff]
    %v149 = vld [vmem:[%s3 + $0x48] sm:$0xff]
    %v150 = vld [vmem:[%s3 + $0x50] sm:$0xff]
    %v151 = vld [vmem:[%s3 + $0x58] sm:$0xff]
    %v152 = vld [vmem:[%s3 + $0x60] sm:$0xff]
    %v153 = vld [vmem:[%s3 + $0x68] sm:$0xff]
    %v154 = vld [vmem:[%s3 + $0x70] sm:$0xff]
    %v155 = vld [vmem:[%s3 + $0x78] sm:$0xff]
    %v156 = vld [vmem:[%s3 + $0x80] sm:$0xff]
    %v157 = vld [vmem:[%s3 + $0x88] sm:$0xff]
    %v158 = vld [vmem:[%s3 + $0x90] sm:$0xff]
    %v159 = vld [vmem:[%s3 + $0x98] sm:$0xff]
    %v160 = vld [vmem:[%s3 + $0xa0] sm:$0xff]
    %v161 = vld [vmem:[%s3 + $0xa8] sm:$0xff]
    %v162 = vld [vmem:[%s3 + $0xb0] sm:$0xff]
    %v163 = vld [vmem:[%s3 + $0xb8] sm:$0xff]
    %v164 = vld [vmem:[%s3 + $0xc0] sm:$0xff]
    %v165 = vld [vmem:[%s3 + $0xc8] sm:$0xff]
    %v166 = vld [vmem:[%s3 + $0xd0] sm:$0xff]
    %v167 = vld [vmem:[%s3 + $0xd8] sm:$0xff]
    %v168 = vld [vmem:[%s3 + $0xe0] sm:$0xff]
    %v169 = vld [vmem:[%s3 + $0xe8] sm:$0xff]
    %v170 = vld [vmem:[%s3 + $0xf0] sm:$0xff]
    %v171 = vld [vmem:[%s3 + $0xf8] sm:$0xff]
    %v172 = vld [vmem:[%s4] sm:$0x3]
    %v174 = vlaneseq
    %v175 = vshrl.u32 %v174, 7
    %v176 = vsub.s32 0, %v175
    %v177 = vrot.slane %v172, %v176
    %v178 = vlaneseq
    %v179 = vshrl.u32 %v178, 7
    %v180 = vsub.s32 1, %v179
    %v181 = vrot.slane %v172, %v180
    %184 = vmatprep.subr.mxu0 %v141
    %185 = vmatpush1.msra.mxu0 %v140
    %186 = vmatprep.subr.mxu0 %v143
    %187 = vmatpush1.msra.mxu0 %v142
    %188 = vmatprep.subr.mxu0 %v145
    %189 = vmatpush1.msra.mxu0 %v144
    %190 = vmatprep.subr.mxu0 %v147
    %191 = vmatpush1.msra.mxu0 %v146
    %192 = vmatprep.subr.mxu0 %v149
    %193 = vmatpush1.msra.mxu0 %v148
    %194 = vmatprep.subr.mxu0 %v151
    %195 = vmatpush1.msra.mxu0 %v150
    %196 = vmatprep.subr.mxu0 %v153
    %197 = vmatpush1.msra.mxu0 %v152
    %198 = vmatprep.subr.mxu0 %v155
    %199 = vmatpush1.msra.mxu0 %v154
    %200 = vmatprep.subr.mxu0 %v157
    %201 = vmatpush1.msra.mxu0 %v156
    %202 = vmatprep.subr.mxu0 %v159
    %203 = vmatpush1.msra.mxu0 %v158
    %204 = vmatprep.subr.mxu0 %v161
    %205 = vmatpush1.msra.mxu0 %v160
    %206 = vmatprep.subr.mxu0 %v163
    %207 = vmatpush1.msra.mxu0 %v162
    %208 = vmatprep.subr.mxu0 %v165
    %209 = vmatpush1.msra.mxu0 %v164
    %210 = vmatprep.subr.mxu0 %v167
    %211 = vmatpush1.msra.mxu0 %v166
    %212 = vmatprep.subr.mxu0 %v169
    %213 = vmatpush1.msra.mxu0 %v168
    %214 = vmatprep.subr.mxu0 %v171
    %215 = vmatpush1.msra.mxu0 %v170
    %216 = vmatprep.subr.mxu0 0.0
    %217 = vmatpush1.msra.mxu0 0.0
    %218 = vmatprep.subr.mxu0 0.0
    %219 = vmatpush1.msra.mxu0 0.0
    %220 = vmatprep.subr.mxu0 0.0
    %221 = vmatpush1.msra.mxu0 0.0
    %222 = vmatprep.subr.mxu0 0.0
    %223 = vmatpush1.msra.mxu0 0.0
    %224 = vmatprep.subr.mxu0 0.0
    %225 = vmatpush1.msra.mxu0 0.0
    %226 = vmatprep.subr.mxu0 0.0
    %227 = vmatpush1.msra.mxu0 0.0
    %228 = vmatprep.subr.mxu0 0.0
    %229 = vmatpush1.msra.mxu0 0.0
    %230 = vmatprep.subr.mxu0 0.0
    %231 = vmatpush1.msra.mxu0 0.0
    %232 = vmatprep.subr.mxu0 0.0
    %233 = vmatpush1.msra.mxu0 0.0
    %234 = vmatprep.subr.mxu0 0.0
    %235 = vmatpush1.msra.mxu0 0.0
    %236 = vmatprep.subr.mxu0 0.0
    %237 = vmatpush1.msra.mxu0 0.0
    %238 = vmatprep.subr.mxu0 0.0
    %239 = vmatpush1.msra.mxu0 0.0
    %240 = vmatprep.subr.mxu0 0.0
    %241 = vmatpush1.msra.mxu0 0.0
    %242 = vmatprep.subr.mxu0 0.0
    %243 = vmatpush1.msra.mxu0 0.0
    %244 = vmatprep.subr.mxu0 0.0
    %245 = vmatpush1.msra.mxu0 0.0
    %246 = vmatprep.subr.mxu0 0.0
    %247 = vmatpush1.msra.mxu0 0.0
    %248 = vmatprep.mubr.f32.mxu0 0.0
    %249 = vmatmul.mubr.f32.gmra.mrb[0].mxu0 %v138
    %v250 = vpop.f32.mrb[0].mxu0
    %v251 = vadd.f32 %v177, %v250
    %v252 = vpop.f32.mrb[0].mxu0
    %v253 = vadd.f32 %v181, %v252
    %254 = vmatprep.mubr.f32.mxu0 0.0
    %255 = vmatmul.mubr.f32.gmra.mrb[0].mxu0 %v139
    %v256 = vpop.f32.mrb[0].mxu0
    %v257 = vadd.f32 %v177, %v256
    %v258 = vpop.f32.mrb[0].mxu0
    %v259 = vadd.f32 %v181, %v258
    %260 = vdwg.mxu0
    %v261 = vld [vmem:[%s9] sm:$0xff]
    %v262 = vld [vmem:[%s9 + $0x8] sm:$0xff]
    %v263 = vmul.f32 %v253, 0.5
    %v264 = vmul.f32 %v259, 0.5
    %v265 = vmul.f32 %v263, 1.442695
    %v266 = vpow.pop %v265
    %v267 = vmul.f32 %v264, 1.442695
    %v268 = vpow.pop %v267
    %v269 = vmul.f32 %v261, %v266
    %v270 = vmul.f32 %v262, %v268
    %v271 = vadd.f32 %v251, %v269
    %v272 = vadd.f32 %v257, %v270
    %v273 = vld [vmem:[%s5] sm:$0xff]
    %v274 = vld [vmem:[%s5 + $0x8] sm:$0xff]
    %v275 = vld [vmem:[%s5 + $0x10] sm:$0xff]
    %v276 = vld [vmem:[%s5 + $0x18] sm:$0xff]
    %v277 = vld [vmem:[%s5 + $0x20] sm:$0xff]
    %v278 = vld [vmem:[%s5 + $0x28] sm:$0xff]
    %v279 = vld [vmem:[%s5 + $0x30] sm:$0xff]
    %v280 = vld [vmem:[%s5 + $0x38] sm:$0xff]
    %v281 = vld [vmem:[%s5 + $0x40] sm:$0xff]
    %v282 = vld [vmem:[%s5 + $0x48] sm:$0xff]
    %v283 = vld [vmem:[%s5 + $0x50] sm:$0xff]
    %v284 = vld [vmem:[%s5 + $0x58] sm:$0xff]
    %v285 = vld [vmem:[%s5 + $0x60] sm:$0xff]
    %v286 = vld [vmem:[%s5 + $0x68] sm:$0xff]
    %v287 = vld [vmem:[%s5 + $0x70] sm:$0xff]
    %v288 = vld [vmem:[%s5 + $0x78] sm:$0xff]
    %v289 = vld [vmem:[%s6] sm:$0x1]
    %v291 = vlaneseq
    %v292 = vshrl.u32 %v291, 7
    %v293 = vsub.s32 0, %v292
    %v294 = vrot.slane %v289, %v293
    %296 = vmatprep.subr.mxu0 0.0
    %297 = vmatpush1.msra.mxu0 %v273
    %298 = vmatprep.subr.mxu0 0.0
    %299 = vmatpush1.msra.mxu0 %v274
    %300 = vmatprep.subr.mxu0 0.0
    %301 = vmatpush1.msra.mxu0 %v275
    %302 = vmatprep.subr.mxu0 0.0
    %303 = vmatpush1.msra.mxu0 %v276
    %304 = vmatprep.subr.mxu0 0.0
    %305 = vmatpush1.msra.mxu0 %v277
    %306 = vmatprep.subr.mxu0 0.0
    %307 = vmatpush1.msra.mxu0 %v278
    %308 = vmatprep.subr.mxu0 0.0
    %309 = vmatpush1.msra.mxu0 %v279
    %310 = vmatprep.subr.mxu0 0.0
    %311 = vmatpush1.msra.mxu0 %v280
    %312 = vmatprep.subr.mxu0 0.0
    %313 = vmatpush1.msra.mxu0 %v281
    %314 = vmatprep.subr.mxu0 0.0
    %315 = vmatpush1.msra.mxu0 %v282
    %316 = vmatprep.subr.mxu0 0.0
    %317 = vmatpush1.msra.mxu0 %v283
    %318 = vmatprep.subr.mxu0 0.0
    %319 = vmatpush1.msra.mxu0 %v284
    %320 = vmatprep.subr.mxu0 0.0
    %321 = vmatpush1.msra.mxu0 %v285
    %322 = vmatprep.subr.mxu0 0.0
    %323 = vmatpush1.msra.mxu0 %v286
    %324 = vmatprep.subr.mxu0 0.0
    %325 = vmatpush1.msra.mxu0 %v287
    %326 = vmatprep.subr.mxu0 0.0
    %327 = vmatpush1.msra.mxu0 %v288
    %328 = vmatprep.subr.mxu0 0.0
    %329 = vmatpush1.msra.mxu0 0.0
    %330 = vmatprep.subr.mxu0 0.0
    %331 = vmatpush1.msra.mxu0 0.0
    %332 = vmatprep.subr.mxu0 0.0
    %333 = vmatpush1.msra.mxu0 0.0
    %334 = vmatprep.subr.mxu0 0.0
    %335 = vmatpush1.msra.mxu0 0.0
    %336 = vmatprep.subr.mxu0 0.0
    %337 = vmatpush1.msra.mxu0 0.0
    %338 = vmatprep.subr.mxu0 0.0
    %339 = vmatpush1.msra.mxu0 0.0
    %340 = vmatprep.subr.mxu0 0.0
    %341 = vmatpush1.msra.mxu0 0.0
    %342 = vmatprep.subr.mxu0 0.0
    %343 = vmatpush1.msra.mxu0 0.0
    %344 = vmatprep.subr.mxu0 0.0
    %345 = vmatpush1.msra.mxu0 0.0
    %346 = vmatprep.subr.mxu0 0.0
    %347 = vmatpush1.msra.mxu0 0.0
    %348 = vmatprep.subr.mxu0 0.0
    %349 = vmatpush1.msra.mxu0 0.0
    %350 = vmatprep.subr.mxu0 0.0
    %351 = vmatpush1.msra.mxu0 0.0
    %352 = vmatprep.subr.mxu0 0.0
    %353 = vmatpush1.msra.mxu0 0.0
    %354 = vmatprep.subr.mxu0 0.0
    %355 = vmatpush1.msra.mxu0 0.0
    %356 = vmatprep.subr.mxu0 0.0
    %357 = vmatpush1.msra.mxu0 0.0
    %358 = vmatprep.subr.mxu0 0.0
    %359 = vmatpush1.msra.mxu0 0.0
    %360 = vmatprep.mubr.f32.mxu0 0.0
    %361 = vmatmul.mubr.f32.gmra.mrb[0].mxu0 %v271
    %v362 = vpop.f32.mrb[0].mxu0
    %v363 = vadd.f32 %v294, %v362
    %v364 = vpop.f32.mrb[0].mxu0
    %365 = vmatprep.mubr.f32.mxu0 0.0
    %366 = vmatmul.mubr.f32.gmra.mrb[0].mxu0 %v272
    %v367 = vpop.f32.mrb[0].mxu0
    %v368 = vadd.f32 %v294, %v367
    %v369 = vpop.f32.mrb[0].mxu0
    %370 = vdwg.mxu0
    %v371 = vmax.f32 %v363, 0.0
    %v372 = vmax.f32 %v368, 0.0
    %v373 = vld [vmem:[%s7] sm:$0xff]
    %v374 = vld [vmem:[%s7 + $0x8] sm:$0xff]
    %v375 = vld [vmem:[%s7 + $0x10] sm:$0xff]
    %v376 = vld [vmem:[%s7 + $0x18] sm:$0xff]
    %v377 = vld [vmem:[%s7 + $0x20] sm:$0xff]
    %v378 = vld [vmem:[%s7 + $0x28] sm:$0xff]
    %v379 = vld [vmem:[%s7 + $0x30] sm:$0xff]
    %v380 = vld [vmem:[%s7 + $0x38] sm:$0xff]
    %v381 = vld [vmem:[%s7 + $0x40] sm:$0xff]
    %v382 = vld [vmem:[%s7 + $0x48] sm:$0xff]
    %v383 = vld [vmem:[%s7 + $0x50] sm:$0xff]
    %v384 = vld [vmem:[%s7 + $0x58] sm:$0xff]
    %v385 = vld [vmem:[%s7 + $0x60] sm:$0xff]
    %v386 = vld [vmem:[%s7 + $0x68] sm:$0xff]
    %v387 = vld [vmem:[%s7 + $0x70] sm:$0xff]
    %v388 = vld [vmem:[%s7 + $0x78] sm:$0xff]
    %v389 = vld [vmem:[%s8] sm:$0x1]
    %v391 = vlaneseq
    %v392 = vshrl.u32 %v391, 7
    %v393 = vsub.s32 0, %v392
    %v394 = vrot.slane %v389, %v393
    %396 = vmatprep.subr.mxu0 0.0
    %397 = vmatpush1.msra.mxu0 %v373
    %398 = vmatprep.subr.mxu0 0.0
    %399 = vmatpush1.msra.mxu0 %v374
    %400 = vmatprep.subr.mxu0 0.0
    %401 = vmatpush1.msra.mxu0 %v375
    %402 = vmatprep.subr.mxu0 0.0
    %403 = vmatpush1.msra.mxu0 %v376
    %404 = vmatprep.subr.mxu0 0.0
    %405 = vmatpush1.msra.mxu0 %v377
    %406 = vmatprep.subr.mxu0 0.0
    %407 = vmatpush1.msra.mxu0 %v378
    %408 = vmatprep.subr.mxu0 0.0
    %409 = vmatpush1.msra.mxu0 %v379
    %410 = vmatprep.subr.mxu0 0.0
    %411 = vmatpush1.msra.mxu0 %v380
    %412 = vmatprep.subr.mxu0 0.0
    %413 = vmatpush1.msra.mxu0 %v381
    %414 = vmatprep.subr.mxu0 0.0
    %415 = vmatpush1.msra.mxu0 %v382
    %416 = vmatprep.subr.mxu0 0.0
    %417 = vmatpush1.msra.mxu0 %v383
    %418 = vmatprep.subr.mxu0 0.0
    %419 = vmatpush1.msra.mxu0 %v384
    %420 = vmatprep.subr.mxu0 0.0
    %421 = vmatpush1.msra.mxu0 %v385
    %422 = vmatprep.subr.mxu0 0.0
    %423 = vmatpush1.msra.mxu0 %v386
    %424 = vmatprep.subr.mxu0 0.0
    %425 = vmatpush1.msra.mxu0 %v387
    %426 = vmatprep.subr.mxu0 0.0
    %427 = vmatpush1.msra.mxu0 %v388
    %428 = vmatprep.subr.mxu0 0.0
    %429 = vmatpush1.msra.mxu0 0.0
    %430 = vmatprep.subr.mxu0 0.0
    %431 = vmatpush1.msra.mxu0 0.0
    %432 = vmatprep.subr.mxu0 0.0
    %433 = vmatpush1.msra.mxu0 0.0
    %434 = vmatprep.subr.mxu0 0.0
    %435 = vmatpush1.msra.mxu0 0.0
    %436 = vmatprep.subr.mxu0 0.0
    %437 = vmatpush1.msra.mxu0 0.0
    %438 = vmatprep.subr.mxu0 0.0
    %439 = vmatpush1.msra.mxu0 0.0
    %440 = vmatprep.subr.mxu0 0.0
    %441 = vmatpush1.msra.mxu0 0.0
    %442 = vmatprep.subr.mxu0 0.0
    %443 = vmatpush1.msra.mxu0 0.0
    %444 = vmatprep.subr.mxu0 0.0
    %445 = vmatpush1.msra.mxu0 0.0
    %446 = vmatprep.subr.mxu0 0.0
    %447 = vmatpush1.msra.mxu0 0.0
    %448 = vmatprep.subr.mxu0 0.0
    %449 = vmatpush1.msra.mxu0 0.0
    %450 = vmatprep.subr.mxu0 0.0
    %451 = vmatpush1.msra.mxu0 0.0
    %452 = vmatprep.subr.mxu0 0.0
    %453 = vmatpush1.msra.mxu0 0.0
    %454 = vmatprep.subr.mxu0 0.0
    %455 = vmatpush1.msra.mxu0 0.0
    %456 = vmatprep.subr.mxu0 0.0
    %457 = vmatpush1.msra.mxu0 0.0
    %458 = vmatprep.subr.mxu0 0.0
    %459 = vmatpush1.msra.mxu0 0.0
    %460 = vmatprep.mubr.f32.mxu0 0.0
    %461 = vmatmul.mubr.f32.gmra.mrb[0].mxu0 %v371
    %v462 = vpop.f32.mrb[0].mxu0
    %v463 = vadd.f32 %v394, %v462
    %v464 = vpop.f32.mrb[0].mxu0
    %465 = vmatprep.mubr.f32.mxu0 0.0
    %466 = vmatmul.mubr.f32.gmra.mrb[0].mxu0 %v372
    %v467 = vpop.f32.mrb[0].mxu0
    %v468 = vadd.f32 %v394, %v467
    %v469 = vpop.f32.mrb[0].mxu0
    %470 = vdwg.mxu0
    %v471 = vxor.u32 %v463, 2147483648
    %v472 = vxor.u32 %v468, 2147483648
    %v473 = vmul.f32 %v471, 1.442695
    %v474 = vpow.pop %v473
    %v475 = vmul.f32 %v472, 1.442695
    %v476 = vpow.pop %v475
    %v477 = vadd.f32 %v474, 1.0
    %v478 = vadd.f32 %v476, 1.0
    %v479 = vrcp.pop %v477
    %v480 = vmul.f32 1.0, %v479
    %v481 = vrcp.pop %v478
    %v482 = vmul.f32 1.0, %v481
    %483 = vst [vmem:[#allocation2] sm:$0xff] %v480
    %484 = vst [vmem:[#allocation2 + $0x8] sm:$0xff] %v482
    %485 = vst [vmem:[%s11] sm:$0xff] %v251
    %486 = vst [vmem:[%s11 + $0x8] sm:$0xff] %v253
    %487 = vst [vmem:[%s11 + $0x10] sm:$0xff] %v257
    %488 = vst [vmem:[%s11 + $0x18] sm:$0xff] %v259
    // Predicated region
    $region42: #{vae_forward.1} parent=1 // pred_check
      _
    $region43: #{vae_forward.1} parent=1 // pred_check_branch
      %490 = sbr.rel (0) target = $region45
    $region44: #{vae_forward.1} parent=1 // pred_region
      %s492 = ssub.s32 256, 256
      %493 = vsyncadd [#allocation3], %s492
      %s494 = sshll.u32 [#allocation2], 4
      %s495 = int_to_ptr.vmem [resolvable:$true] %s494
      %500 = dma.vmem_to_hbm [thread:$0]  %s495, 256, %s10, [#allocation3], 128, 128, 8
    $region45: #{vae_forward.1} parent=1 // pred_fallthru
      _
    // Predicated region
    $region46: #{vae_forward.1} parent=1 // pred_check
      _
    $region47: #{vae_forward.1} parent=1 // pred_check_branch
      %502 = sbr.rel (0) target = $region49
    $region48: #{vae_forward.1} parent=1 // pred_region
      _
    $region49: #{vae_forward.1} parent=1 // pred_fallthru
      _
    // Predicated region
    $region50: #{vae_forward.1} parent=1 // pred_check
      _
    $region51: #{vae_forward.1} parent=1 // pred_check_branch
      %504 = sbr.rel (0) target = $region53
    $region52: #{vae_forward.1} parent=1 // pred_region
      %505 = dma.done [#allocation3], 256
    $region53: #{vae_forward.1} parent=1 // pred_fallthru
      _
    // Predicated region
    $region54: #{vae_forward.1} parent=1 // pred_check
      _
    $region55: #{vae_forward.1} parent=1 // pred_check_branch
      %507 = sbr.rel (0) target = $region57
    $region56: #{vae_forward.1} parent=1 // pred_region
      _
    $region57: #{vae_forward.1} parent=1 // pred_fallthru
      _
    %508 = vsyncpa [#allocation3], 1

</llo_original>
